<compile_context>
chip_gen: v7x
topology: tpu7x:2x2x1
jax: 0.10.0
libtpu: 0.0.40
codegen_flags: <defaults>
</compile_context>

<pallas_src>
import math

import jax
import jax.numpy as jnp
from jax.experimental import pallas as pl
from jax.experimental.pallas import tpu as pltpu

_LANE = 128


def _physical_vmem_bytes() -> int:
    try:
        return int(pltpu.get_tpu_info().vmem_capacity_bytes)
    except Exception:
        return 64 << 20  # conservative default (v7x floor)


def _sublane_pack(itemsize: int) -> int:
    # native sublane packing: 8 rows (f32) / 16 (bf16) / 32 (int8)
    return max(8, 32 // max(1, itemsize))


def _vmem_limit_bytes(footprint_bytes: int, physical_bytes: int) -> int:
    hard_cap = (physical_bytes * 7) // 8
    return int(min(hard_cap, max(32 << 20, footprint_bytes + (8 << 20))))


def _choose_outer_tile(outer, row_bytes, budget_bytes, pack, target_block_bytes):
    """Rows per grid step.  Double-buffered footprint ~= 4 * TO * row_bytes."""
    max_by_budget = max(1, budget_bytes // (4 * row_bytes))
    want = max(1, min(outer, max_by_budget, max(1, target_block_bytes // row_bytes)))
    if want >= outer:
        # Whole outer axis fits in one block.  Split in two when cheap so both
        # v7x TensorCores get work (no-op on single-core v5e/v6e).
        if outer >= 2 * pack:
            half = (outer + 1) // 2
            return ((half + pack - 1) // pack) * pack
        return outer
    if pack > 1:
        # partial blocks on the sublane axis must honour the sublane pack
        want = max(pack, (want // pack) * pack)
    return min(want, outer)


def _choose_lane_tile(inner, total, itemsize, budget_bytes):
    # Prefer the full lane extent (contiguous DMAs); shrink only if a single
    # (1, total, inner) double-buffered block would blow the VMEM budget.
    if inner <= _LANE or 4 * total * inner * itemsize <= budget_bytes:
        return inner
    tl = budget_bytes // (4 * total * itemsize)
    tl = max(_LANE, (tl // _LANE) * _LANE)
    return min(tl, inner)


def _make_lane_concat_kernel(lane_offsets, lane_sizes):
    def kernel(*refs):
        in_refs, o_ref = refs[:-1], refs[-1]
        for r, off, sz in zip(in_refs, lane_offsets, lane_sizes):
            o_ref[:, off:off + sz] = r[...]
    return kernel


def _make_row_concat_kernel(offsets, sizes):
    def kernel(*refs):
        in_refs, o_ref = refs[:-1], refs[-1]
        for r, off, sz in zip(in_refs, offsets, sizes):
            o_ref[:, off:off + sz, :] = r[...]
    return kernel


def concat(xs, dimension: int = 1, *, force_pallas: bool = False,
           small_fallback_bytes: int = 1 << 20,
           target_block_bytes: int = 4 << 20):
    """Pallas-TPU equivalent of torch.cat(xs, dim=dimension)."""
    xs_all = [jnp.asarray(x) for x in xs]
    nd = xs_all[0].ndim
    d = dimension % nd
    dtype = jnp.result_type(*xs_all)
    xs_all = [x.astype(dtype) for x in xs_all]
    itemsize = jnp.dtype(dtype).itemsize

    base = xs_all[0].shape
    for x in xs_all:
        assert x.ndim == nd, "all inputs must have the same rank"
        assert x.shape[:d] == base[:d] and x.shape[d + 1:] == base[d + 1:], (
            "all dims except the concat dim must match")

    sizes_all = [int(x.shape[d]) for x in xs_all]
    total = sum(sizes_all)
    out_shape = base[:d] + (total,) + base[d + 1:]

    outer = math.prod(base[:d])       # dims before the concat axis
    inner = math.prod(base[d + 1:])   # dims after the concat axis
    out_bytes = outer * total * inner * itemsize

    # Degenerate shapes / zero-size-only inputs / tiny concats -> XLA's fused
    # concat (pallas_call launch overhead dominates tiny copies).
    pairs = [(x, s) for x, s in zip(xs_all, sizes_all) if s > 0]
    if (not pairs) or outer == 0 or inner == 0 or total == 0:
        return jnp.concatenate(xs_all, axis=d)
    if (not force_pallas) and out_bytes < small_fallback_bytes:
        return jnp.concatenate(xs_all, axis=d)

    xs_k, sizes = map(list, zip(*pairs))

    vmem = _physical_vmem_bytes()
    budget = (vmem * 3) // 4            # ~48 MiB on v7x, ~96 MiB on v5e/v6e
    pack = _sublane_pack(itemsize)

    offsets, off = [], 0
    for s in sizes:
        offsets.append(off)
        off += s

    # ---------- path 1: lane-collapsed 2-D view ----------
    # (outer, size_i*inner) -> (outer, total*inner).  When inner % 128 == 0 the
    # per-input lane offsets are 128-aligned -> unmasked, contiguous stores.
    # inner == 1 (concat along the last axis) also routes here.
    row_bytes = total * inner * itemsize
    lane_ok = (inner == 1 or inner % _LANE == 0)
    lane_ok = lane_ok and 4 * min(outer, pack) * row_bytes <= budget
    if lane_ok:
        xs2 = [x.reshape(outer, s * inner) for x, s in zip(xs_k, sizes)]
        lane_sizes = [s * inner for s in sizes]
        lane_offsets = [o * inner for o in offsets]

        to = _choose_outer_tile(outer, row_bytes, budget, pack, target_block_bytes)
        grid = (pl.cdiv(outer, to),)
        footprint = 4 * to * row_bytes

        out2 = pl.pallas_call(
            _make_lane_concat_kernel(lane_offsets, lane_sizes),
            out_shape=jax.ShapeDtypeStruct((outer, total * inner), dtype),
            grid=grid,
            in_specs=[pl.BlockSpec((to, ls), lambda n: (n, 0)) for ls in lane_sizes],
            out_specs=pl.BlockSpec((to, total * inner), lambda n: (n, 0)),
            compiler_params=pltpu.CompilerParams(
                dimension_semantics=("parallel",),
                vmem_limit_bytes=_vmem_limit_bytes(footprint, vmem)),
        )(*xs2)
        return out2.reshape(out_shape)

    # ---------- path 2: general 3-D (outer, size, inner) view ----------
    if 4 * total * min(inner, _LANE) * itemsize > budget:
        # Even a single (1, total, 128) block cannot be double-buffered.
        # TODO(synk): pathological `total` could use a manual HBM->HBM DMA path.
        return jnp.concatenate(xs_all, axis=d)

    tl = _choose_lane_tile(inner, total, itemsize, budget)
    row_bytes = total * tl * itemsize
    to = _choose_outer_tile(outer, row_bytes, budget, 1, target_block_bytes)
    grid = (pl.cdiv(outer, to), pl.cdiv(inner, tl))
    footprint = 4 * to * row_bytes

    xs3 = [x.reshape(outer, s, inner) for x, s in zip(xs_k, sizes)]
    out3 = pl.pallas_call(
        _make_row_concat_kernel(offsets, sizes),
        out_shape=jax.ShapeDtypeStruct((outer, total, inner), dtype),
        grid=grid,
        in_specs=[pl.BlockSpec((to, s, tl), lambda n, t: (n, 0, t)) for s in sizes],
        out_specs=pl.BlockSpec((to, total, tl), lambda n, t: (n, 0, t)),
        compiler_params=pltpu.CompilerParams(
            dimension_semantics=("parallel", "parallel"),
            vmem_limit_bytes=_vmem_limit_bytes(footprint, vmem)),
    )(*xs3)
    return out3.reshape(out_shape)


if __name__ == "__main__":
    key = jax.random.PRNGKey(0)
    k1, k2, k3, k4, k5, k6, k7, k8, k9 = jax.random.split(key, 9)

    # 1) Typical usage: channel concat (NCHW, dim=1) -> lane-collapsed path.
    x1 = jax.random.normal(k1, (2, 4, 16, 16), jnp.float32)
    x2 = jax.random.normal(k2, (2, 4, 16, 16), jnp.float32)
    x3 = jax.random.normal(k3, (2, 8, 16, 16), jnp.float32)
    out = jax.block_until_ready(concat([x1, x2, x3], dimension=1, force_pallas=True))
    ref = jnp.concatenate([x1, x2, x3], axis=1)
    assert out.shape == (2, 16, 16, 16), out.shape
    assert jnp.array_equal(out, ref)

    # 2) Channel concat with outer large enough to split across grid steps.
    y1 = jax.random.normal(k4, (16, 8, 16, 16), jnp.float32)
    y2 = jax.random.normal(k5, (16, 8, 16, 16), jnp.float32)
    out = jax.block_until_ready(concat([y1, y2], dimension=1, force_pallas=True))
    assert jnp.array_equal(out, jnp.concatenate([y1, y2], axis=1))

    # 3) Concat along the last axis (inner == 1 special case).
    z1 = jax.random.normal(k6, (2, 4, 16, 8), jnp.float32)
    z2 = jax.random.normal(k7, (2, 4, 16, 8), jnp.float32)
    out = jax.block_until_ready(concat([z1, z2], dimension=-1, force_pallas=True))
    assert jnp.array_equal(out, jnp.concatenate([z1, z2], axis=-1))

    # 4) Concat along a middle axis with inner not a multiple of 128 (3-D path).
    w1 = jax.random.normal(k8, (2, 4, 16, 16), jnp.float32)
    w2 = jax.random.normal(k9, (2, 4, 8, 16), jnp.float32)
    out = jax.block_until_ready(concat([w1, w2], dimension=2, force_pallas=True))
    assert jnp.array_equal(out, jnp.concatenate([w1, w2], axis=2))

    # 5) bf16 channel concat (sublane pack = 16).
    b1 = x1.astype(jnp.bfloat16)
    b2 = x3.astype(jnp.bfloat16)
    out = jax.block_until_ready(concat([b1, b2], dimension=1, force_pallas=True))
    assert jnp.array_equal(out, jnp.concatenate([b1, b2], axis=1))

    # 6) Tiny-size fallback path (routes to jnp.concatenate).
    out = jax.block_until_ready(concat([x1, x2], dimension=1))
    assert jnp.array_equal(out, jnp.concatenate([x1, x2], axis=1))

    print("KERNEL_OK")
</pallas_src>

<mosaic_0001>
module attributes {stable_mosaic.version = 11 : i64} {
  func.func @kernel(%arg0: i32, %arg1: memref<2x1024xf32, #tpu.memory_space<vmem>>, %arg2: memref<2x1024xf32, #tpu.memory_space<vmem>>, %arg3: memref<2x2048xf32, #tpu.memory_space<vmem>>, %arg4: memref<2x4096xf32, #tpu.memory_space<vmem>>) attributes {dimension_semantics = [#tpu.dimension_semantics<parallel>], iteration_bounds = array<i64: 1>, scalar_prefetch = 0 : i64, scratch_operands = 0 : i64, tpu.core_type = #tpu.core_type<tc>, window_params = [{transform_indices = @transform_0, window_bounds = array<i64: 2, 1024>}, {transform_indices = @transform_1, window_bounds = array<i64: 2, 1024>}, {transform_indices = @transform_2, window_bounds = array<i64: 2, 2048>}, {transform_indices = @transform_3, window_bounds = array<i64: 2, 4096>}]} {
    %c0 = arith.constant 0 : index
    %c0_0 = arith.constant 0 : index
    %0 = vector.load %arg1[%c0, %c0_0] : memref<2x1024xf32, #tpu.memory_space<vmem>>, vector<2x1024xf32>
    %c0_1 = arith.constant 0 : index
    %c0_2 = arith.constant 0 : index
    %1 = vector.load %arg4[%c0_1, %c0_2] : memref<2x4096xf32, #tpu.memory_space<vmem>>, vector<2x1024xf32>
    tpu.vector_store %arg4[%c0_1, %c0_2], %0 {strides = array<i32>} : memref<2x4096xf32, #tpu.memory_space<vmem>>, vector<2x1024xf32>,
    %c0_3 = arith.constant 0 : index
    %c0_4 = arith.constant 0 : index
    %2 = vector.load %arg2[%c0_3, %c0_4] : memref<2x1024xf32, #tpu.memory_space<vmem>>, vector<2x1024xf32>
    %c0_5 = arith.constant 0 : index
    %c1024 = arith.constant 1024 : index
    %3 = vector.load %arg4[%c0_5, %c1024] : memref<2x4096xf32, #tpu.memory_space<vmem>>, vector<2x1024xf32>
    tpu.vector_store %arg4[%c0_5, %c1024], %2 {strides = array<i32>} : memref<2x4096xf32, #tpu.memory_space<vmem>>, vector<2x1024xf32>,
    %c0_6 = arith.constant 0 : index
    %c0_7 = arith.constant 0 : index
    %4 = vector.load %arg3[%c0_6, %c0_7] : memref<2x2048xf32, #tpu.memory_space<vmem>>, vector<2x2048xf32>
    %c0_8 = arith.constant 0 : index
    %c2048 = arith.constant 2048 : index
    %5 = vector.load %arg4[%c0_8, %c2048] : memref<2x4096xf32, #tpu.memory_space<vmem>>, vector<2x2048xf32>
    tpu.vector_store %arg4[%c0_8, %c2048], %4 {strides = array<i32>} : memref<2x4096xf32, #tpu.memory_space<vmem>>, vector<2x2048xf32>,
    return
  }
  func.func @transform_0(%arg0: i32) -> (i32, i32) {
    %c0_i32 = arith.constant 0 : i32
    %c0_i32_0 = arith.constant 0 : i32
    return %arg0, %c0_i32 : i32, i32
  }
  func.func @transform_1(%arg0: i32) -> (i32, i32) {
    %c0_i32 = arith.constant 0 : i32
    %c0_i32_0 = arith.constant 0 : i32
    return %arg0, %c0_i32 : i32, i32
  }
  func.func @transform_2(%arg0: i32) -> (i32, i32) {
    %c0_i32 = arith.constant 0 : i32
    %c0_i32_0 = arith.constant 0 : i32
    return %arg0, %c0_i32 : i32, i32
  }
  func.func @transform_3(%arg0: i32) -> (i32, i32) {
    %c0_i32 = arith.constant 0 : i32
    %c0_i32_0 = arith.constant 0 : i32
    return %arg0, %c0_i32 : i32, i32
  }
}

</mosaic_0001>

<llo_original>
// kernel: tpu_custom_call.1
$region0: #{tpu_custom_call.1}
  #allocation0 [shape = 'u32[]', space=smem, size = 0x4, offset = 0x4, fixed_abs, tag = 'smem constant byte address 0x4 - core index']
  #allocation1 [shape = 'u32[144,128]{1,0:T(1,128)}', space=vmem, size = 0x12000, scoped, tag = 'internal scratch']
  %s0 = inlined_call_operand.hbm [shape: f32[2,1024], index: 0, kind: input, shape index: {}]
  %s1 = inlined_call_operand.hbm [shape: f32[2,1024], index: 1, kind: input, shape index: {}]
  %s2 = inlined_call_operand.hbm [shape: f32[2,2048], index: 2, kind: input, shape index: {}]
  %s3 = inlined_call_operand.hbm [shape: f32[2,4096], index: 3, kind: output, shape index: {}]
  %s4 = sld [smem:[#allocation0]]
  $region34: #{tpu_custom_call.1} parent=0
    _
  %s6 = ssub.s32 1, %s4
  %s7 = scalar_select 0, %s6, %s4
  $region1: #{tpu_custom_call.1} parent=0
    #allocation2 [shape = 'u8[8192]{0}', space=vmem, size = 0x2000, scoped, tag = 'input window, operand 0, single buffered']
    #allocation3 [shape = 's32[1]{0}', space=sflag, size = 0x4, scoped, tag = 'scoped memory for tpu_custom_call.1']
    #allocation4 [shape = 's32[1]{0}', space=sflag, size = 0x4, scoped, tag = 'scoped memory for tpu_custom_call.1']
    #allocation5 [shape = 'u8[8192]{0}', space=vmem, size = 0x2000, scoped, tag = 'input window, operand 1, single buffered']
    #allocation6 [shape = 's32[1]{0}', space=sflag, size = 0x4, scoped, tag = 'scoped memory for tpu_custom_call.1']
    #allocation7 [shape = 'u8[16384]{0}', space=vmem, size = 0x4000, scoped, tag = 'input window, operand 2, single buffered']
    #allocation8 [shape = 'u8[32768]{0}', space=vmem, size = 0x8000, scoped, tag = 'output window, operand 0, single buffered']
    %8 = vsyncpa [#allocation3], 0
    %9 = vsyncpa [#allocation6], 0
    %10 = vsyncpa [#allocation4], 0
    // Predicated region
    $region2: #{tpu_custom_call.1} parent=1 // pred_check
      _
    $region3: #{tpu_custom_call.1} parent=1 // pred_check_branch
      %12 = sbr.rel (0) target = $region5
    $region4: #{tpu_custom_call.1} parent=1 // pred_region
      %s14 = ssub.s32 256, 256
      %15 = vsyncadd [#allocation3], %s14
      %s17 = sshll.u32 [#allocation2], 4
      %s18 = int_to_ptr.vmem [resolvable:$true] %s17
      %20 = dma.hbm_to_vmem [thread:$0]  %s0, 256, %s18, [#allocation3]
    $region5: #{tpu_custom_call.1} parent=1 // pred_fallthru
      _
    // Predicated region
    $region6: #{tpu_custom_call.1} parent=1 // pred_check
      _
    $region7: #{tpu_custom_call.1} parent=1 // pred_check_branch
      %22 = sbr.rel (0) target = $region9
    $region8: #{tpu_custom_call.1} parent=1 // pred_region
      %s24 = ssub.s32 256, 256
      %25 = vsyncadd [#allocation6], %s24
      %s27 = sshll.u32 [#allocation5], 4
      %s28 = int_to_ptr.vmem [resolvable:$true] %s27
      %30 = dma.hbm_to_vmem [thread:$0]  %s1, 256, %s28, [#allocation6]
    $region9: #{tpu_custom_call.1} parent=1 // pred_fallthru
      _
    // Predicated region
    $region10: #{tpu_custom_call.1} parent=1 // pred_check
      _
    $region11: #{tpu_custom_call.1} parent=1 // pred_check_branch
      %32 = sbr.rel (0) target = $region13
    $region12: #{tpu_custom_call.1} parent=1 // pred_region
      %s34 = ssub.s32 512, 512
      %35 = vsyncadd [#allocation6], %s34
      %s37 = sshll.u32 [#allocation7], 4
      %s38 = int_to_ptr.vmem [resolvable:$true] %s37
      %40 = dma.hbm_to_vmem [thread:$0]  %s2, 512, %s38, [#allocation6]
    $region13: #{tpu_custom_call.1} parent=1 // pred_fallthru
      _
    // Predicated region
    $region14: #{tpu_custom_call.1} parent=1 // pred_check
      _
    $region15: #{tpu_custom_call.1} parent=1 // pred_check_branch
      %42 = sbr.rel (0) target = $region17
    $region16: #{tpu_custom_call.1} parent=1 // pred_region
      %43 = dma.done [#allocation3], 256
    $region17: #{tpu_custom_call.1} parent=1 // pred_fallthru
      _
    // Predicated region
    $region18: #{tpu_custom_call.1} parent=1 // pred_check
      _
    $region19: #{tpu_custom_call.1} parent=1 // pred_check_branch
      %45 = sbr.rel (0) target = $region21
    $region20: #{tpu_custom_call.1} parent=1 // pred_region
      %46 = dma.done [#allocation6], 256
    $region21: #{tpu_custom_call.1} parent=1 // pred_fallthru
      _
    // Predicated region
    $region22: #{tpu_custom_call.1} parent=1 // pred_check
      _
    $region23: #{tpu_custom_call.1} parent=1 // pred_check_branch
      %48 = sbr.rel (0) target = $region25
    $region24: #{tpu_custom_call.1} parent=1 // pred_region
      %49 = dma.done [#allocation6], 512
    $region25: #{tpu_custom_call.1} parent=1 // pred_fallthru
      _
    %v50 = vld [vmem:[#allocation2] sm:$0xff]
    %v51 = vld [vmem:[#allocation2 + $0x8] sm:$0xff]
    %52 = vst [vmem:[#allocation8] sm:$0xff] %v50
    %53 = vst [vmem:[#allocation8 + $0x8] sm:$0xff] %v51
    %v54 = vld [vmem:[#allocation5] sm:$0xff]
    %v55 = vld [vmem:[#allocation5 + $0x8] sm:$0xff]
    %56 = vst [vmem:[#allocation8 + $0x10] sm:$0xff] %v54
    %57 = vst [vmem:[#allocation8 + $0x18] sm:$0xff] %v55
    %v58 = vld [vmem:[#allocation7] sm:$0xff]
    %v59 = vld [vmem:[#allocation7 + $0x8] sm:$0xff]
    %v60 = vld [vmem:[#allocation7 + $0x10] sm:$0xff]
    %v61 = vld [vmem:[#allocation7 + $0x18] sm:$0xff]
    %62 = vst [vmem:[#allocation8 + $0x20] sm:$0xff] %v58
    %63 = vst [vmem:[#allocation8 + $0x28] sm:$0xff] %v59
    %64 = vst [vmem:[#allocation8 + $0x30] sm:$0xff] %v60
    %65 = vst [vmem:[#allocation8 + $0x38] sm:$0xff] %v61
    // Predicated region
    $region26: #{tpu_custom_call.1} parent=1 // pred_check
      _
    $region27: #{tpu_custom_call.1} parent=1 // pred_check_branch
      %67 = sbr.rel (0) target = $region29
    $region28: #{tpu_custom_call.1} parent=1 // pred_region
      %s69 = ssub.s32 1024, 1024
      %70 = vsyncadd [#allocation4], %s69
      %s72 = sshll.u32 [#allocation8], 4
      %s73 = int_to_ptr.vmem [resolvable:$true] %s72
      %75 = dma.vmem_to_hbm [thread:$0]  %s73, 1024, %s3, [#allocation4]
    $region29: #{tpu_custom_call.1} parent=1 // pred_fallthru
      _
    // Predicated region
    $region30: #{tpu_custom_call.1} parent=1 // pred_check
      _
    $region31: #{tpu_custom_call.1} parent=1 // pred_check_branch
      %77 = sbr.rel (0) target = $region33
    $region32: #{tpu_custom_call.1} parent=1 // pred_region
      %78 = dma.done [#allocation4], 1024
    $region33: #{tpu_custom_call.1} parent=1 // pred_fallthru
      _
    %79 = vsyncpa [#allocation3], 1
    %80 = vsyncpa [#allocation6], 1
    %81 = vsyncpa [#allocation4], 1

</llo_original>
